<compile_context>
chip_gen: v7x
topology: tpu7x:2x2x1
jax: 0.10.0
libtpu: 0.0.40
codegen_flags: <defaults>
</compile_context>

<pallas_src>
import functools

import jax
import jax.numpy as jnp
from jax.experimental import pallas as pl
from jax.experimental.pallas import tpu as pltpu

ALPHA = 0.35
GAMMA = 1.5

LANES = 128
MAX_ROW_TILE = 8192  # hard cap on rows per grid step


def _pick_tiling(rows, in_itemsize):
    """Pick (block_rows, vmem_limit_bytes) from the chip's VMEM capacity."""
    try:
        vmem_cap = int(pltpu.get_tpu_info().vmem_capacity_bytes)
    except Exception:  # interpret mode / older runtimes: assume smallest (v7x per-TC)
        vmem_cap = 64 << 20
    # Raise the scoped-VMEM limit well past the 16/32 MiB defaults, but leave
    # headroom below physical capacity (important on v7x's 64 MiB).
    vmem_limit = int(min(vmem_cap - (16 << 20), 100 << 20))
    vmem_limit = max(vmem_limit, 32 << 20)

    # Per-row VMEM budget: 2 inputs x 2 pipeline buffers in their streamed
    # dtype, plus ~6 live full-block f32 temporaries (log terms, bce, pt,
    # pow_term, focal) the compiler may materialize for the elementwise chain.
    per_row = 2 * 2 * LANES * in_itemsize + 6 * LANES * 4
    max_rows = max((vmem_limit // 2) // per_row, 512)
    max_rows = min(max_rows, MAX_ROW_TILE)

    if rows <= max_rows:
        # Block == full array dim is always a legal block shape.
        return rows, vmem_limit
    block_rows = max((max_rows // 512) * 512, 512)  # multiple of 512: ok for f32/bf16/int8 tiling
    return block_rows, vmem_limit


def _focal_loss_block_kernel(x_ref, t_ref, partial_ref, *, gamma, binary_targets,
                             valid_rows, block_rows, need_row_mask):
    p = x_ref[...].astype(jnp.float32)
    t = t_ref[...].astype(jnp.float32)

    if binary_targets:
        # Fast path, exact only for hard 0/1 targets: select pt directly and
        # clamp bce at 100 (mirrors the -100 log clamp). 1 log instead of
        # 2 logs + 1 exp -> halves EUP traffic (the v7x bottleneck).
        pt = jnp.where(t > 0.5, p, 1.0 - p)
        bce = jnp.minimum(-jnp.log(pt), 100.0)
        one_minus_pt = jnp.maximum(1.0 - pt, 0.0)
    else:
        # General path: PyTorch BCELoss clamps each log term at -100 before the
        # (1-t)/t multiplies.
        log_p = jnp.maximum(jnp.log(p), -100.0)
        log_1mp = jnp.maximum(jnp.log(1.0 - p), -100.0)
        bce = -(t * log_p + (1.0 - t) * log_1mp)
        pt = jnp.exp(-bce)
        one_minus_pt = jnp.maximum(1.0 - pt, 0.0)  # numerically >= 0

    if gamma == 1.5:
        # x**1.5 == x*sqrt(x): one EUP sqrt + one VPU mul; avoids exp(1.5*log(x))
        # and the -inf intermediate at x == 0.
        pow_term = one_minus_pt * jnp.sqrt(one_minus_pt)
    elif float(gamma).is_integer() and gamma >= 0:
        pow_term = one_minus_pt ** int(gamma)
    else:
        pow_term = jnp.power(one_minus_pt, gamma)

    # Alpha multiply and /N are hoisted out of the per-element path.
    focal = pow_term * bce

    def _store(vals):
        # Per-block per-lane partial sums (lane-dense); cross-lane / cross-block
        # reduction happens once, outside the kernel.
        partial_ref[...] = jnp.sum(vals, axis=0, keepdims=True).reshape(1, 1, LANES)

    if need_row_mask:
        i = pl.program_id(0)
        is_last = i == pl.num_programs(0) - 1

        # Only the ragged last block pays for iota + compare + select; the mask
        # must be applied BEFORE the sum (padded rows may hold NaN/Inf garbage).
        @pl.when(is_last)
        def _():
            row = i * block_rows + jax.lax.broadcasted_iota(jnp.int32, focal.shape, 0)
            _store(jnp.where(row < valid_rows, focal, 0.0))

        @pl.when(jnp.logical_not(is_last))
        def _():
            _store(focal)
    else:
        _store(focal)


def focal_loss(inputs, targets, alpha=ALPHA, gamma=GAMMA, *,
               binary_targets=False, stream_dtype=None):
    """Mean focal loss over all elements. `inputs` are probabilities in (0,1).

    binary_targets: enable the exact-for-0/1-labels fast path (2 transcendentals
        per element instead of 4). Keep False for soft targets.
    stream_dtype: optionally cast inputs/targets to this dtype (e.g. bf16) before
        streaming them through HBM; math is still done in f32 in-kernel.
    """
    assert inputs.shape == targets.shape
    total_n = inputs.size

    if stream_dtype is not None:
        inputs = inputs.astype(stream_dtype)
        targets = targets.astype(stream_dtype)

    flat_x = inputs.reshape(-1)   # contiguous flatten: no HBM copy
    flat_t = targets.reshape(-1)

    lane_pad = (-total_n) % LANES
    if lane_pad:
        # Rare ragged-lane fallback (size not a multiple of 128): pad the tail
        # with p=1, t=1 -> bce=0 -> focal=0 on both code paths.
        # TODO(synk): replace this pad (one extra HBM pass) with 1-D blocks +
        # an in-kernel lane mask for non-128-divisible inputs.
        flat_x = jnp.pad(flat_x, (0, lane_pad), constant_values=1.0)
        flat_t = jnp.pad(flat_t, (0, lane_pad), constant_values=1.0)

    rows = flat_x.size // LANES
    x2d = flat_x.reshape(rows, LANES)
    t2d = flat_t.reshape(rows, LANES)

    in_itemsize = max(x2d.dtype.itemsize, t2d.dtype.itemsize)
    block_rows, vmem_limit = _pick_tiling(rows, in_itemsize)
    num_blocks = pl.cdiv(rows, block_rows)
    need_row_mask = (rows % block_rows) != 0

    kernel = functools.partial(
        _focal_loss_block_kernel,
        gamma=gamma,
        binary_targets=binary_targets,
        valid_rows=rows,
        block_rows=block_rows,
        need_row_mask=need_row_mask,
    )

    partials = pl.pallas_call(
        kernel,
        out_shape=jax.ShapeDtypeStruct((num_blocks, 1, LANES), jnp.float32),
        grid_spec=pltpu.PrefetchScalarGridSpec(
            num_scalar_prefetch=0,
            grid=(num_blocks,),
            in_specs=[
                pl.BlockSpec((block_rows, LANES), lambda i: (i, 0)),
                pl.BlockSpec((block_rows, LANES), lambda i: (i, 0)),
            ],
            out_specs=pl.BlockSpec((1, 1, LANES), lambda i: (i, 0, 0)),
        ),
        compiler_params=pltpu.CompilerParams(
            # Independent per-block partials -> megacore-shardable on v7x.
            # TODO(synk): verify 2-TC sharding on v7x in a trace; if a single TC
            # shows up, switch this axis to pltpu.CORE_PARALLEL.
            dimension_semantics=("parallel",),
            vmem_limit_bytes=vmem_limit,
        ),
    )(x2d, t2d)

    # Cross-lane + cross-block reduction, alpha and 1/N applied once.
    return (jnp.sum(partials) * (alpha / total_n)).astype(jnp.float32)


def _reference_focal_loss(inputs, targets, alpha=ALPHA, gamma=GAMMA):
    p = inputs.astype(jnp.float32)
    t = targets.astype(jnp.float32)
    bce = -(t * jnp.maximum(jnp.log(p), -100.0)
            + (1.0 - t) * jnp.maximum(jnp.log(1.0 - p), -100.0))
    pt = jnp.exp(-bce)
    return jnp.mean(alpha * (1.0 - pt) ** gamma * bce)


if __name__ == "__main__":
    key = jax.random.PRNGKey(0)
    k1, k2 = jax.random.split(key)

    # Small shapes consistent with a classification head output (probabilities).
    shape = (2, 4, 16, 16)  # NCHW-like; the loss is shape-agnostic
    logits = jax.random.normal(k1, shape, dtype=jnp.float32)
    inputs = jax.nn.sigmoid(logits)                                   # probs in (0,1)
    targets = jax.random.bernoulli(k2, 0.5, shape).astype(jnp.float32)

    # 1) Default path: exact PyTorch-module semantics (f32 streaming, general bce).
    loss = jax.block_until_ready(focal_loss(inputs, targets))
    ref = jax.block_until_ready(_reference_focal_loss(inputs, targets))
    assert jnp.allclose(loss, ref, rtol=1e-5, atol=1e-6), (loss, ref)

    # 2) bf16 input streaming (halves HBM bytes); compare against a reference
    #    computed on the same bf16-rounded inputs (identical in-kernel f32 math).
    loss_bf16 = jax.block_until_ready(
        focal_loss(inputs, targets, stream_dtype=jnp.bfloat16))
    ref_bf16 = jax.block_until_ready(
        _reference_focal_loss(inputs.astype(jnp.bfloat16),
                              targets.astype(jnp.bfloat16)))
    assert jnp.allclose(loss_bf16, ref_bf16, rtol=1e-5, atol=1e-6), (loss_bf16, ref_bf16)

    # 3) Binary-target fast path (exact for 0/1 labels up to transcendental rounding).
    loss_fast = jax.block_until_ready(
        focal_loss(inputs, targets, binary_targets=True))
    assert jnp.allclose(loss_fast, ref, rtol=1e-4, atol=1e-6), (loss_fast, ref)

    print("KERNEL_OK")
</pallas_src>

<mosaic_0001>
module attributes {stable_mosaic.version = 11 : i64} {
  func.func @_focal_loss_block_kernel(%arg0: i32, %arg1: memref<16x128xf32, #tpu.memory_space<vmem>>, %arg2: memref<16x128xf32, #tpu.memory_space<vmem>>, %arg3: memref<1x1x128xf32, #tpu.memory_space<vmem>>) attributes {dimension_semantics = [#tpu.dimension_semantics<parallel>], iteration_bounds = array<i64: 1>, scalar_prefetch = 0 : i64, scratch_operands = 0 : i64, tpu.core_type = #tpu.core_type<tc>, window_params = [{transform_indices = @transform_0, window_bounds = array<i64: 16, 128>}, {transform_indices = @transform_1, window_bounds = array<i64: 16, 128>}, {transform_indices = @transform_2, window_bounds = array<i64: 1, 1, 128>}]} {
    %c0 = arith.constant 0 : index
    %c0_0 = arith.constant 0 : index
    %0 = vector.load %arg1[%c0, %c0_0] : memref<16x128xf32, #tpu.memory_space<vmem>>, vector<16x128xf32>
    %c0_1 = arith.constant 0 : index
    %c0_2 = arith.constant 0 : index
    %1 = vector.load %arg2[%c0_1, %c0_2] : memref<16x128xf32, #tpu.memory_space<vmem>>, vector<16x128xf32>
    %2 = math.log %0 : vector<16x128xf32>
    %cst = arith.constant -1.000000e+02 : f32
    %3 = vector.broadcast %cst : f32 to vector<16x128xf32>
    %4 = arith.maximumf %2, %3 : vector<16x128xf32>
    %cst_3 = arith.constant 1.000000e+00 : f32
    %5 = vector.broadcast %cst_3 : f32 to vector<16x128xf32>
    %6 = arith.subf %5, %0 : vector<16x128xf32>
    %7 = math.log %6 : vector<16x128xf32>
    %cst_4 = arith.constant -1.000000e+02 : f32
    %8 = vector.broadcast %cst_4 : f32 to vector<16x128xf32>
    %9 = arith.maximumf %7, %8 : vector<16x128xf32>
    %10 = arith.mulf %1, %4 : vector<16x128xf32>
    %cst_5 = arith.constant 1.000000e+00 : f32
    %11 = vector.broadcast %cst_5 : f32 to vector<16x128xf32>
    %12 = arith.subf %11, %1 : vector<16x128xf32>
    %13 = arith.mulf %12, %9 : vector<16x128xf32>
    %14 = arith.addf %10, %13 : vector<16x128xf32>
    %cst_6 = arith.constant 0.000000e+00 : f32
    %15 = vector.broadcast %cst_6 : f32 to vector<16x128xf32>
    %16 = arith.subf %15, %14 : vector<16x128xf32>
    %cst_7 = arith.constant 0.000000e+00 : f32
    %17 = vector.broadcast %cst_7 : f32 to vector<16x128xf32>
    %18 = arith.subf %17, %16 : vector<16x128xf32>
    %19 = math.exp %18 : vector<16x128xf32>
    %cst_8 = arith.constant 1.000000e+00 : f32
    %20 = vector.broadcast %cst_8 : f32 to vector<16x128xf32>
    %21 = arith.subf %20, %19 : vector<16x128xf32>
    %cst_9 = arith.constant 0.000000e+00 : f32
    %22 = vector.broadcast %cst_9 : f32 to vector<16x128xf32>
    %23 = arith.maximumf %21, %22 : vector<16x128xf32>
    %24 = math.sqrt %23 : vector<16x128xf32>
    %25 = arith.mulf %23, %24 : vector<16x128xf32>
    %26 = arith.mulf %25, %16 : vector<16x128xf32>
    %cst_10 = arith.constant dense<0.000000e+00> : vector<128xf32>
    %27 = vector.multi_reduction <add>, %26, %cst_10 [0] : vector<16x128xf32> to vector<128xf32>
    %28 = vector.shape_cast %27 : vector<128xf32> to vector<1x128xf32>
    %29 = vector.shape_cast %28 : vector<1x128xf32> to vector<1x1x128xf32>
    %c0_11 = arith.constant 0 : index
    %c0_12 = arith.constant 0 : index
    %c0_13 = arith.constant 0 : index
    %30 = vector.load %arg3[%c0_11, %c0_12, %c0_13] : memref<1x1x128xf32, #tpu.memory_space<vmem>>, vector<1x1x128xf32>
    tpu.vector_store %arg3[%c0_11, %c0_12, %c0_13], %29 {strides = array<i32>} : memref<1x1x128xf32, #tpu.memory_space<vmem>>, vector<1x1x128xf32>,
    return
  }
  func.func @transform_0(%arg0: i32) -> (i32, i32) {
    %c0_i32 = arith.constant 0 : i32
    %c0_i32_0 = arith.constant 0 : i32
    return %arg0, %c0_i32 : i32, i32
  }
  func.func @transform_1(%arg0: i32) -> (i32, i32) {
    %c0_i32 = arith.constant 0 : i32
    %c0_i32_0 = arith.constant 0 : i32
    return %arg0, %c0_i32 : i32, i32
  }
  func.func @transform_2(%arg0: i32) -> (i32, i32, i32) {
    %c0_i32 = arith.constant 0 : i32
    %c0_i32_0 = arith.constant 0 : i32
    %c0_i32_1 = arith.constant 0 : i32
    return %arg0, %c0_i32, %c0_i32_0 : i32, i32, i32
  }
}

</mosaic_0001>

<llo_original>
// kernel: tpu_custom_call.1
$region0: #{tpu_custom_call.1}
  #allocation0 [shape = 'u32[]', space=smem, size = 0x4, offset = 0x4, fixed_abs, tag = 'smem constant byte address 0x4 - core index']
  #allocation1 [shape = 'u32[144,128]{1,0:T(1,128)}', space=vmem, size = 0x12000, scoped, tag = 'internal scratch']
  %s0 = inlined_call_operand.hbm [shape: f32[16,128], index: 0, kind: input, shape index: {}]
  %s1 = inlined_call_operand.hbm [shape: f32[16,128], index: 1, kind: input, shape index: {}]
  %s2 = inlined_call_operand.hbm [shape: f32[1,1,128], index: 2, kind: output, shape index: {}]
  %s3 = sld [smem:[#allocation0]]
  $region26: #{tpu_custom_call.1} parent=0
    _
  %s5 = ssub.s32 1, %s3
  %s6 = scalar_select 0, %s5, %s3
  $region1: #{tpu_custom_call.1} parent=0
    #allocation2 [shape = 'u8[8192]{0}', space=vmem, size = 0x2000, scoped, tag = 'input window, operand 0, single buffered']
    #allocation3 [shape = 's32[1]{0}', space=sflag, size = 0x4, scoped, tag = 'scoped memory for tpu_custom_call.1']
    #allocation4 [shape = 's32[1]{0}', space=sflag, size = 0x4, scoped, tag = 'scoped memory for tpu_custom_call.1']
    #allocation5 [shape = 'u8[8192]{0}', space=vmem, size = 0x2000, scoped, tag = 'input window, operand 1, single buffered']
    #allocation6 [shape = 's32[1]{0}', space=sflag, size = 0x4, scoped, tag = 'scoped memory for tpu_custom_call.1']
    #allocation7 [shape = 'u8[512]{0}', space=vmem, size = 0x400, scoped, tag = 'output window, operand 0, single buffered']
    %7 = vsyncpa [#allocation3], 0
    %8 = vsyncpa [#allocation6], 0
    %9 = vsyncpa [#allocation4], 0
    // Predicated region
    $region2: #{tpu_custom_call.1} parent=1 // pred_check
      _
    $region3: #{tpu_custom_call.1} parent=1 // pred_check_branch
      %11 = sbr.rel (0) target = $region5
    $region4: #{tpu_custom_call.1} parent=1 // pred_region
      %s13 = ssub.s32 256, 256
      %14 = vsyncadd [#allocation3], %s13
      %s15 = sshll.u32 [#allocation2], 4
      %s16 = int_to_ptr.vmem [resolvable:$true] %s15
      %21 = dma.hbm_to_vmem [thread:$0]  %s0, 256, %s16, [#allocation3], 128, 128, 8
    $region5: #{tpu_custom_call.1} parent=1 // pred_fallthru
      _
    // Predicated region
    $region6: #{tpu_custom_call.1} parent=1 // pred_check
      _
    $region7: #{tpu_custom_call.1} parent=1 // pred_check_branch
      %23 = sbr.rel (0) target = $region9
    $region8: #{tpu_custom_call.1} parent=1 // pred_region
      %s25 = ssub.s32 256, 256
      %26 = vsyncadd [#allocation6], %s25
      %s27 = sshll.u32 [#allocation5], 4
      %s28 = int_to_ptr.vmem [resolvable:$true] %s27
      %33 = dma.hbm_to_vmem [thread:$0]  %s1, 256, %s28, [#allocation6], 128, 128, 8
    $region9: #{tpu_custom_call.1} parent=1 // pred_fallthru
      _
    // Predicated region
    $region10: #{tpu_custom_call.1} parent=1 // pred_check
      _
    $region11: #{tpu_custom_call.1} parent=1 // pred_check_branch
      %35 = sbr.rel (0) target = $region13
    $region12: #{tpu_custom_call.1} parent=1 // pred_region
      %36 = dma.done [#allocation3], 256
    $region13: #{tpu_custom_call.1} parent=1 // pred_fallthru
      _
    // Predicated region
    $region14: #{tpu_custom_call.1} parent=1 // pred_check
      _
    $region15: #{tpu_custom_call.1} parent=1 // pred_check_branch
      %38 = sbr.rel (0) target = $region17
    $region16: #{tpu_custom_call.1} parent=1 // pred_region
      %39 = dma.done [#allocation6], 256
    $region17: #{tpu_custom_call.1} parent=1 // pred_fallthru
      _
    %v40 = vld [vmem:[#allocation2] sm:$0xff]
    %v41 = vld [vmem:[#allocation2 + $0x8] sm:$0xff]
    %v42 = vld [vmem:[#allocation5] sm:$0xff]
    %v43 = vld [vmem:[#allocation5 + $0x8] sm:$0xff]
    %v44 = vlog2.pop %v40
    %v45 = vmul.f32 %v44, 0.6931472
    %v46 = vlog2.pop %v41
    %v47 = vmul.f32 %v46, 0.6931472
    %v48 = vmax.f32 %v45, -100.0
    %v49 = vmax.f32 %v47, -100.0
    %v50 = vsub.f32 1.0, %v40
    %v51 = vsub.f32 1.0, %v41
    %v52 = vlog2.pop %v50
    %v53 = vmul.f32 %v52, 0.6931472
    %v54 = vlog2.pop %v51
    %v55 = vmul.f32 %v54, 0.6931472
    %v56 = vmax.f32 %v53, -100.0
    %v57 = vmax.f32 %v55, -100.0
    %v58 = vmul.f32 %v42, %v48
    %v59 = vmul.f32 %v43, %v49
    %v60 = vsub.f32 1.0, %v42
    %v61 = vsub.f32 1.0, %v43
    %v62 = vmul.f32 %v60, %v56
    %v63 = vmul.f32 %v61, %v57
    %v64 = vadd.f32 %v58, %v62
    %v65 = vadd.f32 %v59, %v63
    %v66 = vsub.f32 0.0, %v64
    %v67 = vsub.f32 0.0, %v65
    %v68 = vsub.f32 0.0, %v66
    %v69 = vsub.f32 0.0, %v67
    %v70 = vmul.f32 %v68, 1.442695
    %v71 = vpow.pop %v70
    %v72 = vmul.f32 %v69, 1.442695
    %v73 = vpow.pop %v72
    %v74 = vsub.f32 1.0, %v71
    %v75 = vsub.f32 1.0, %v73
    %v76 = vmax.f32 %v74, 0.0
    %v77 = vmax.f32 %v75, 0.0
    %v78 = vrsqrt.pop %v76
    %v79 = vmul.f32 %v76, %v78
    %vm80 = vcmp.eq.f32.partialorder %v76, inf
    %v81 = vsel %vm80, %v76, %v79
    %vm82 = vcmp.eq.f32.partialorder %v76, 0.0
    %v83 = vand.u32 %v76, 2147483648
    %v84 = vsel %vm82, %v83, %v81
    %v85 = vrsqrt.pop %v77
    %v86 = vmul.f32 %v77, %v85
    %vm87 = vcmp.eq.f32.partialorder %v77, inf
    %v88 = vsel %vm87, %v77, %v86
    %vm89 = vcmp.eq.f32.partialorder %v77, 0.0
    %v90 = vand.u32 %v77, 2147483648
    %v91 = vsel %vm89, %v90, %v88
    %v92 = vmul.f32 %v76, %v84
    %v93 = vmul.f32 %v77, %v91
    %v94 = vmul.f32 %v92, %v66
    %v95 = vmul.f32 %v93, %v67
    %v96 = vadd.f32 %v94, %v95
    %v97 = vrot.slane %v96, 4
    %v98 = vadd.f32 %v96, %v97
    %v99 = vrot.slane %v98, 2
    %v100 = vadd.f32 %v98, %v99
    %v101 = vrot.slane %v100, 1
    %v102 = vadd.f32 %v100, %v101
    %103 = vst [vmem:[#allocation7] sm:$0x1] %v102
    // Predicated region
    $region18: #{tpu_custom_call.1} parent=1 // pred_check
      _
    $region19: #{tpu_custom_call.1} parent=1 // pred_check_branch
      %105 = sbr.rel (0) target = $region21
    $region20: #{tpu_custom_call.1} parent=1 // pred_region
      %s107 = ssub.s32 16, 16
      %108 = vsyncadd [#allocation4], %s107
      %s110 = sshll.u32 [#allocation7], 4
      %s111 = int_to_ptr.vmem [resolvable:$true] %s110
      %113 = dma.vmem_to_hbm [thread:$0]  %s111, 16, %s2, [#allocation4]
    $region21: #{tpu_custom_call.1} parent=1 // pred_fallthru
      _
    // Predicated region
    $region22: #{tpu_custom_call.1} parent=1 // pred_check
      _
    $region23: #{tpu_custom_call.1} parent=1 // pred_check_branch
      %115 = sbr.rel (0) target = $region25
    $region24: #{tpu_custom_call.1} parent=1 // pred_region
      %116 = dma.done [#allocation4], 16
    $region25: #{tpu_custom_call.1} parent=1 // pred_fallthru
      _
    %117 = vsyncpa [#allocation3], 1
    %118 = vsyncpa [#allocation6], 1
    %119 = vsyncpa [#allocation4], 1

</llo_original>
